<compile_context>
chip_gen: v6e
topology: v6e:2x2x1
jax: 0.10.0
libtpu: 0.0.40
codegen_flags: <defaults>
</compile_context>

<pallas_src>
import math
import numpy as np
import jax
import jax.numpy as jnp
from jax.experimental import pallas as pl
from jax.experimental.pallas import tpu as pltpu


def lora_linear_kernel(x_ref, wa_ref, ba_ref, wd_ref, bd_ref, o_ref):
    # x_ref:  (TM, in_dim)        compute dtype
    # wa_ref: (in_dim, rank)      compute dtype     ba_ref: (1, rank)  f32
    # wd_ref: (rank, TN)          compute dtype     bd_ref: (1, TN)    f32
    # o_ref:  (TM, TN)            original input dtype
    x = x_ref[...]
    h = jnp.dot(x, wa_ref[...], preferred_element_type=jnp.float32)
    h = h + ba_ref[...]
    if wd_ref.dtype != jnp.float32:
        # Deliberate downcast of the f32 accumulator for bf16 compute paths so
        # the second matmul stays on the native MXU path.  f32 inputs skip it.
        h = h.astype(wd_ref.dtype)
    out = jnp.dot(h, wd_ref[...], preferred_element_type=jnp.float32)
    out = out + bd_ref[...]
    o_ref[...] = out.astype(o_ref.dtype)


def _round_up(x, m):
    return ((x + m - 1) // m) * m


def _round_down(x, m):
    return (x // m) * m


def _vmem_capacity_bytes():
    try:
        return int(pltpu.get_tpu_info().vmem_capacity_bytes)
    except Exception:
        return 64 * 1024 * 1024  # conservative: v7x per-TensorCore physical VMEM


def _choose_tiles(M, in_dim, rank, out_dim, cdt_bytes, out_bytes, budget_bytes):
    # Tile out_dim only when it is large; tn is a multiple of 128 in that case,
    # otherwise the full (lane-dense as possible) out_dim is written per step.
    tn = out_dim if out_dim <= 2048 else 2048

    # Second-to-last-dim granularity: 8 for f32, 16 for bf16 (sublane packing).
    sub = max(8, 32 // max(cdt_bytes, 1))

    # VMEM bytes independent of tm: weights + biases (wa/ba single-buffered,
    # wd/bd counted double-buffered to be safe).
    fixed = (in_dim * rank) * cdt_bytes + rank * 4 \
            + 2 * ((rank * tn) * cdt_bytes + tn * 4)
    # VMEM bytes per row of the M tile: double-buffered x and out blocks plus
    # the f32 intermediate h.
    per_row = 2 * in_dim * cdt_bytes + 2 * tn * out_bytes + rank * 4

    tm_budget = max(sub, (budget_bytes - fixed) // max(per_row, 1))
    tm_budget = max(sub, _round_down(int(tm_budget), sub))

    if M <= sub:
        tm = M  # block == full array dim: always a legal block shape
    else:
        tm = min(_round_down(M, sub), 1024, tm_budget)
        # Keep >= 2 M-steps so v7x's two TensorCores both get work.
        if tm >= M and M >= 2 * sub:
            tm = _round_up(pl.cdiv(M, 2), sub)
    return tm, tn


def lora_linear(x, wa, ba, wd, bd, *, tm=None, tn=None, compute_dtype=None,
                vmem_limit_bytes=None):
    """x:[M,in_dim], wa:[in_dim,rank], ba:[rank], wd:[rank,out_dim], bd:[out_dim]."""
    M, in_dim = x.shape
    rank, out_dim = wd.shape
    assert wa.shape == (in_dim, rank)
    out_dtype = x.dtype

    cdt = np.dtype(compute_dtype) if compute_dtype is not None else np.dtype(x.dtype)
    xk = x.astype(cdt)
    wak = wa.astype(cdt)
    wdk = wd.astype(cdt)
    ba2 = ba.reshape(1, rank).astype(jnp.float32)     # biases stay f32
    bd2 = bd.reshape(1, out_dim).astype(jnp.float32)

    if vmem_limit_bytes is None:
        vmem_limit_bytes = int(_vmem_capacity_bytes() * 0.8)   # ~20% headroom
    budget = int(vmem_limit_bytes * 0.85)

    auto_tm, auto_tn = _choose_tiles(M, in_dim, rank, out_dim,
                                     cdt.itemsize, np.dtype(out_dtype).itemsize,
                                     budget)
    if tm is None:
        tm = auto_tm
    if tn is None:
        tn = auto_tn

    grid = (pl.cdiv(M, tm), pl.cdiv(out_dim, tn))

    def build(single_buffer_invariants):
        inv = {"pipeline_mode": pl.Buffered(1)} if single_buffer_invariants else {}
        # wd/bd are also grid-invariant when out_dim is not tiled.
        inv_n = inv if grid[1] == 1 else {}
        in_specs = [
            pl.BlockSpec((tm, in_dim), lambda i, j: (i, 0)),
            pl.BlockSpec((in_dim, rank), lambda i, j: (0, 0), **inv),
            pl.BlockSpec((1, rank), lambda i, j: (0, 0), **inv),
            pl.BlockSpec((rank, tn), lambda i, j: (0, j), **inv_n),
            pl.BlockSpec((1, tn), lambda i, j: (0, j), **inv_n),
        ]
        out_specs = pl.BlockSpec((tm, tn), lambda i, j: (i, j))
        return pl.pallas_call(
            lora_linear_kernel,
            out_shape=jax.ShapeDtypeStruct((M, out_dim), out_dtype),
            grid_spec=pltpu.PrefetchScalarGridSpec(
                num_scalar_prefetch=0,
                grid=grid,
                in_specs=in_specs,
                out_specs=out_specs),
            compiler_params=pltpu.CompilerParams(
                dimension_semantics=("parallel", "parallel"),
                vmem_limit_bytes=vmem_limit_bytes),
        )

    args = (xk, wak, ba2, wdk, bd2)
    try:
        return jax.block_until_ready(build(True)(*args))
    except Exception:
        # pipeline_mode=Buffered(1) not supported on this jax build: fall back
        # to default double-buffered specs (identical numerics).
        return jax.block_until_ready(build(False)(*args))


def xavier_uniform(key, shape):
    # shape = (out_features, in_features), matches torch.nn.init.xavier_uniform_
    fan_out, fan_in = shape
    limit = math.sqrt(6.0 / (fan_in + fan_out))
    return jax.random.uniform(key, shape, dtype=jnp.float32,
                              minval=-limit, maxval=limit)


if __name__ == "__main__":
    in_dim, out_dim, rank = 32, 32, 16
    batch = 8

    key = jax.random.PRNGKey(0)
    k_x, k_adp, k_dec = jax.random.split(key, 3)

    # Parameters (deterministic xavier_uniform weights, zero biases — mirrors
    # the PyTorch __init__; torch stores Linear weights as [out, in]).
    w_adp = xavier_uniform(k_adp, (rank, in_dim))
    b_adp = jnp.zeros((rank,), dtype=jnp.float32)
    w_dec = xavier_uniform(k_dec, (out_dim, rank))
    b_dec = jnp.zeros((out_dim,), dtype=jnp.float32)

    # Pre-transpose to kernel layout (wrapper glue, not hot path).
    wa = w_adp.T                                   # [in_dim, rank]
    wd = w_dec.T                                   # [rank, out_dim]

    x = jax.random.normal(k_x, (batch, in_dim), dtype=jnp.float32)

    # Reference (plain JAX == PyTorch semantics).
    ref = (x @ wa + b_adp) @ wd + b_dec

    # f32 path: exact vs reference.
    out_f32 = lora_linear(x, wa, b_adp, wd, b_dec)
    out_f32 = jax.block_until_ready(out_f32)
    assert out_f32.shape == (batch, out_dim)
    assert jnp.allclose(out_f32, ref, atol=1e-5, rtol=1e-5)

    # bf16 compute path (v6e/v7x bandwidth optimization): f32 accumulation,
    # looser tolerance is expected and deliberate.
    out_bf16 = lora_linear(x, wa, b_adp, wd, b_dec, compute_dtype=jnp.bfloat16)
    out_bf16 = jax.block_until_ready(out_bf16)
    assert out_bf16.shape == (batch, out_dim)
    assert jnp.allclose(out_bf16.astype(jnp.float32), ref, atol=1e-1, rtol=1e-1)

    print("KERNEL_OK")
</pallas_src>

<mosaic_0001>
module attributes {stable_mosaic.version = 11 : i64} {
  func.func @lora_linear_kernel(%arg0: i32, %arg1: i32, %arg2: memref<8x32xf32, #tpu.memory_space<vmem>>, %arg3: memref<32x16xf32, #tpu.memory_space<vmem>>, %arg4: memref<1x16xf32, #tpu.memory_space<vmem>>, %arg5: memref<16x32xf32, #tpu.memory_space<vmem>>, %arg6: memref<1x32xf32, #tpu.memory_space<vmem>>, %arg7: memref<8x32xf32, #tpu.memory_space<vmem>>) attributes {dimension_semantics = [#tpu.dimension_semantics<parallel>, #tpu.dimension_semantics<parallel>], iteration_bounds = array<i64: 1, 1>, scalar_prefetch = 0 : i64, scratch_operands = 0 : i64, tpu.core_type = #tpu.core_type<tc>, window_params = [{transform_indices = @transform_0, window_bounds = array<i64: 8, 32>}, {pipeline_mode = #tpu.pipeline_mode<synchronous>, transform_indices = @transform_1, window_bounds = array<i64: 32, 16>}, {pipeline_mode = #tpu.pipeline_mode<synchronous>, transform_indices = @transform_2, window_bounds = array<i64: 1, 16>}, {pipeline_mode = #tpu.pipeline_mode<synchronous>, transform_indices = @transform_3, window_bounds = array<i64: 16, 32>}, {pipeline_mode = #tpu.pipeline_mode<synchronous>, transform_indices = @transform_4, window_bounds = array<i64: 1, 32>}, {transform_indices = @transform_5, window_bounds = array<i64: 8, 32>}]} {
    %c0 = arith.constant 0 : index
    %c0_0 = arith.constant 0 : index
    %0 = vector.load %arg2[%c0, %c0_0] : memref<8x32xf32, #tpu.memory_space<vmem>>, vector<8x32xf32>
    %c0_1 = arith.constant 0 : index
    %c0_2 = arith.constant 0 : index
    %1 = vector.load %arg3[%c0_1, %c0_2] : memref<32x16xf32, #tpu.memory_space<vmem>>, vector<32x16xf32>
    %cst = arith.constant dense<0.000000e+00> : vector<8x16xf32>
    %2 = tpu.matmul %0, %1, %cst {dimension_numbers = #tpu.dot_dimension_numbers<[1], [0], [0], [1], [0, 0, 1, 1], [], []>} : vector<8x32xf32>, vector<32x16xf32>, vector<8x16xf32> -> vector<8x16xf32>
    %c0_3 = arith.constant 0 : index
    %c0_4 = arith.constant 0 : index
    %3 = vector.load %arg4[%c0_3, %c0_4] : memref<1x16xf32, #tpu.memory_space<vmem>>, vector<1x16xf32>
    %4 = vector.broadcast %3 : vector<1x16xf32> to vector<8x16xf32>
    %5 = arith.addf %2, %4 : vector<8x16xf32>
    %c0_5 = arith.constant 0 : index
    %c0_6 = arith.constant 0 : index
    %6 = vector.load %arg5[%c0_5, %c0_6] : memref<16x32xf32, #tpu.memory_space<vmem>>, vector<16x32xf32>
    %cst_7 = arith.constant dense<0.000000e+00> : vector<8x32xf32>
    %7 = tpu.matmul %5, %6, %cst_7 {dimension_numbers = #tpu.dot_dimension_numbers<[1], [0], [0], [1], [0, 0, 1, 1], [], []>} : vector<8x16xf32>, vector<16x32xf32>, vector<8x32xf32> -> vector<8x32xf32>
    %c0_8 = arith.constant 0 : index
    %c0_9 = arith.constant 0 : index
    %8 = vector.load %arg6[%c0_8, %c0_9] : memref<1x32xf32, #tpu.memory_space<vmem>>, vector<1x32xf32>
    %9 = vector.broadcast %8 : vector<1x32xf32> to vector<8x32xf32>
    %10 = arith.addf %7, %9 : vector<8x32xf32>
    %c0_10 = arith.constant 0 : index
    %c0_11 = arith.constant 0 : index
    %11 = vector.load %arg7[%c0_10, %c0_11] : memref<8x32xf32, #tpu.memory_space<vmem>>, vector<8x32xf32>
    tpu.vector_store %arg7[%c0_10, %c0_11], %10 {strides = array<i32>} : memref<8x32xf32, #tpu.memory_space<vmem>>, vector<8x32xf32>,
    return
  }
  func.func @transform_0(%arg0: i32, %arg1: i32) -> (i32, i32) {
    %c0_i32 = arith.constant 0 : i32
    %c0_i32_0 = arith.constant 0 : i32
    return %arg0, %c0_i32 : i32, i32
  }
  func.func @transform_1(%arg0: i32, %arg1: i32) -> (i32, i32) {
    %c0_i32 = arith.constant 0 : i32
    %c0_i32_0 = arith.constant 0 : i32
    %c0_i32_1 = arith.constant 0 : i32
    return %c0_i32, %c0_i32_0 : i32, i32
  }
  func.func @transform_2(%arg0: i32, %arg1: i32) -> (i32, i32) {
    %c0_i32 = arith.constant 0 : i32
    %c0_i32_0 = arith.constant 0 : i32
    %c0_i32_1 = arith.constant 0 : i32
    return %c0_i32, %c0_i32_0 : i32, i32
  }
  func.func @transform_3(%arg0: i32, %arg1: i32) -> (i32, i32) {
    %c0_i32 = arith.constant 0 : i32
    %c0_i32_0 = arith.constant 0 : i32
    return %c0_i32, %arg1 : i32, i32
  }
  func.func @transform_4(%arg0: i32, %arg1: i32) -> (i32, i32) {
    %c0_i32 = arith.constant 0 : i32
    %c0_i32_0 = arith.constant 0 : i32
    return %c0_i32, %arg1 : i32, i32
  }
  func.func @transform_5(%arg0: i32, %arg1: i32) -> (i32, i32) {
    %c0_i32 = arith.constant 0 : i32
    return %arg0, %arg1 : i32, i32
  }
}

module attributes {stable_mosaic.version = 11 : i64} {
  func.func @lora_linear_kernel(%arg0: i32, %arg1: i32, %arg2: memref<8x32xf32, #tpu.memory_space<vmem>>, %arg3: memref<32x16xf32, #tpu.memory_space<vmem>>, %arg4: memref<1x16xf32, #tpu.memory_space<vmem>>, %arg5: memref<16x32xf32, #tpu.memory_space<vmem>>, %arg6: memref<1x32xf32, #tpu.memory_space<vmem>>, %arg7: memref<8x32xf32, #tpu.memory_space<vmem>>) attributes {dimension_semantics = [#tpu.dimension_semantics<parallel>, #tpu.dimension_semantics<parallel>], iteration_bounds = array<i64: 1, 1>, scalar_prefetch = 0 : i64, scratch_operands = 0 : i64, tpu.core_type = #tpu.core_type<tc>, window_params = [{transform_indices = @transform_0, window_bounds = array<i64: 8, 32>}, {pipeline_mode = #tpu.pipeline_mode<synchronous>, transform_indices = @transform_1, window_bounds = array<i64: 32, 16>}, {pipeline_mode = #tpu.pipeline_mode<synchronous>, transform_indices = @transform_2, window_bounds = array<i64: 1, 16>}, {transform_indices = @transform_3, window_bounds = array<i64: 16, 32>}, {transform_indices = @transform_4, window_bounds = array<i64: 1, 32>}, {transform_indices = @transform_5, window_bounds = array<i64: 8, 32>}]} {
    %c0 = arith.constant 0 : index
    %c0_0 = arith.constant 0 : index
    %0 = vector.load %arg2[%c0, %c0_0] : memref<8x32xf32, #tpu.memory_space<vmem>>, vector<8x32xf32>
    %c0_1 = arith.constant 0 : index
    %c0_2 = arith.constant 0 : index
    %1 = vector.load %arg3[%c0_1, %c0_2] : memref<32x16xf32, #tpu.memory_space<vmem>>, vector<32x16xf32>
    %cst = arith.constant dense<0.000000e+00> : vector<8x16xf32>
    %2 = tpu.matmul %0, %1, %cst {dimension_numbers = #tpu.dot_dimension_numbers<[1], [0], [0], [1], [0, 0, 1, 1], [], []>} : vector<8x32xf32>, vector<32x16xf32>, vector<8x16xf32> -> vector<8x16xf32>
    %c0_3 = arith.constant 0 : index
    %c0_4 = arith.constant 0 : index
    %3 = vector.load %arg4[%c0_3, %c0_4] : memref<1x16xf32, #tpu.memory_space<vmem>>, vector<1x16xf32>
    %4 = vector.broadcast %3 : vector<1x16xf32> to vector<8x16xf32>
    %5 = arith.addf %2, %4 : vector<8x16xf32>
    %c0_5 = arith.constant 0 : index
    %c0_6 = arith.constant 0 : index
    %6 = vector.load %arg5[%c0_5, %c0_6] : memref<16x32xf32, #tpu.memory_space<vmem>>, vector<16x32xf32>
    %cst_7 = arith.constant dense<0.000000e+00> : vector<8x32xf32>
    %7 = tpu.matmul %5, %6, %cst_7 {dimension_numbers = #tpu.dot_dimension_numbers<[1], [0], [0], [1], [0, 0, 1, 1], [], []>} : vector<8x16xf32>, vector<16x32xf32>, vector<8x32xf32> -> vector<8x32xf32>
    %c0_8 = arith.constant 0 : index
    %c0_9 = arith.constant 0 : index
    %8 = vector.load %arg6[%c0_8, %c0_9] : memref<1x32xf32, #tpu.memory_space<vmem>>, vector<1x32xf32>
    %9 = vector.broadcast %8 : vector<1x32xf32> to vector<8x32xf32>
    %10 = arith.addf %7, %9 : vector<8x32xf32>
    %c0_10 = arith.constant 0 : index
    %c0_11 = arith.constant 0 : index
    %11 = vector.load %arg7[%c0_10, %c0_11] : memref<8x32xf32, #tpu.memory_space<vmem>>, vector<8x32xf32>
    tpu.vector_store %arg7[%c0_10, %c0_11], %10 {strides = array<i32>} : memref<8x32xf32, #tpu.memory_space<vmem>>, vector<8x32xf32>,
    return
  }
  func.func @transform_0(%arg0: i32, %arg1: i32) -> (i32, i32) {
    %c0_i32 = arith.constant 0 : i32
    %c0_i32_0 = arith.constant 0 : i32
    return %arg0, %c0_i32 : i32, i32
  }
  func.func @transform_1(%arg0: i32, %arg1: i32) -> (i32, i32) {
    %c0_i32 = arith.constant 0 : i32
    %c0_i32_0 = arith.constant 0 : i32
    %c0_i32_1 = arith.constant 0 : i32
    return %c0_i32, %c0_i32_0 : i32, i32
  }
  func.func @transform_2(%arg0: i32, %arg1: i32) -> (i32, i32) {
    %c0_i32 = arith.constant 0 : i32
    %c0_i32_0 = arith.constant 0 : i32
    %c0_i32_1 = arith.constant 0 : i32
    return %c0_i32, %c0_i32_0 : i32, i32
  }
  func.func @transform_3(%arg0: i32, %arg1: i32) -> (i32, i32) {
    %c0_i32 = arith.constant 0 : i32
    %c0_i32_0 = arith.constant 0 : i32
    return %c0_i32, %arg1 : i32, i32
  }
  func.func @transform_4(%arg0: i32, %arg1: i32) -> (i32, i32) {
    %c0_i32 = arith.constant 0 : i32
    %c0_i32_0 = arith.constant 0 : i32
    return %c0_i32, %arg1 : i32, i32
  }
  func.func @transform_5(%arg0: i32, %arg1: i32) -> (i32, i32) {
    %c0_i32 = arith.constant 0 : i32
    return %arg0, %arg1 : i32, i32
  }
}

</mosaic_0001>

<llo_original>
// kernel: tpu_custom_call.1
$region0: #{tpu_custom_call.1}
  #allocation0 [shape = 'u32[]', space=smem, size = 0x4, offset = 0x4, fixed_abs, tag = 'smem constant byte address 0x4 - core index']
  #allocation1 [shape = 'u32[144,128]{1,0:T(1,128)}', space=vmem, size = 0x12000, scoped, tag = 'internal scratch']
  %s0 = inlined_call_operand.vmem [shape: f32[8,32], index: 0, kind: input, shape index: {}]
  %s1 = inlined_call_operand.vmem [shape: f32[32,16], index: 1, kind: input, shape index: {}]
  %s2 = inlined_call_operand.vmem [shape: f32[1,16], index: 2, kind: input, shape index: {}]
  %s3 = inlined_call_operand.vmem [shape: f32[16,32], index: 3, kind: input, shape index: {}]
  %s4 = inlined_call_operand.vmem [shape: f32[1,32], index: 4, kind: input, shape index: {}]
  %s5 = inlined_call_operand.hbm [shape: f32[8,32], index: 5, kind: output, shape index: {}]
  %s6 = sld [smem:[#allocation0]]
  $region30: #{tpu_custom_call.1} parent=0
    _
  %s8 = ssub.s32 1, %s6
  %s9 = scalar_select 0, %s8, %s6
  $region1: #{tpu_custom_call.1} parent=0
    #allocation2 [shape = 'u8[4096]{0}', space=vmem, size = 0x1000, scoped, tag = 'output window, operand 0, single buffered']
    #allocation3 [shape = 's32[1]{0}', space=sflag, size = 0x4, scoped, tag = 'scoped memory for tpu_custom_call.1']
    %10 = vsyncpa [#allocation3], 0
    // Predicated region
    $region2: #{tpu_custom_call.1} parent=1 // pred_check
      _
    $region3: #{tpu_custom_call.1} parent=1 // pred_check_branch
      %12 = sbr.rel (0) target = $region5
    $region4: #{tpu_custom_call.1} parent=1 // pred_region
      _
    $region5: #{tpu_custom_call.1} parent=1 // pred_fallthru
      _
    // Predicated region
    $region6: #{tpu_custom_call.1} parent=1 // pred_check
      _
    $region7: #{tpu_custom_call.1} parent=1 // pred_check_branch
      %14 = sbr.rel (0) target = $region9
    $region8: #{tpu_custom_call.1} parent=1 // pred_region
      _
    $region9: #{tpu_custom_call.1} parent=1 // pred_fallthru
      _
    // Predicated region
    $region10: #{tpu_custom_call.1} parent=1 // pred_check
      _
    $region11: #{tpu_custom_call.1} parent=1 // pred_check_branch
      %16 = sbr.rel (0) target = $region13
    $region12: #{tpu_custom_call.1} parent=1 // pred_region
      _
    $region13: #{tpu_custom_call.1} parent=1 // pred_fallthru
      _
    // Predicated region
    $region14: #{tpu_custom_call.1} parent=1 // pred_check
      _
    $region15: #{tpu_custom_call.1} parent=1 // pred_check_branch
      %18 = sbr.rel (0) target = $region17
    $region16: #{tpu_custom_call.1} parent=1 // pred_region
      _
    $region17: #{tpu_custom_call.1} parent=1 // pred_fallthru
      _
    // Predicated region
    $region18: #{tpu_custom_call.1} parent=1 // pred_check
      _
    $region19: #{tpu_custom_call.1} parent=1 // pred_check_branch
      %20 = sbr.rel (0) target = $region21
    $region20: #{tpu_custom_call.1} parent=1 // pred_region
      _
    $region21: #{tpu_custom_call.1} parent=1 // pred_fallthru
      _
    %v21 = vld [vmem:[%s0] sm:$0xff]
    %v22 = vld [vmem:[%s1] sm:$0xff]
    %v23 = vld [vmem:[%s1 + $0x8] sm:$0xff]
    %v24 = vld [vmem:[%s1 + $0x10] sm:$0xff]
    %v25 = vld [vmem:[%s1 + $0x18] sm:$0xff]
    %v26 = vld [vmem:[%s2] sm:$0x1]
    %v28 = vlaneseq
    %v29 = vshrl.u32 %v28, 7
    %v30 = vsub.s32 0, %v29
    %v31 = vrot.slane %v26, %v30
    %vm33 = vcmask 261120
    %v35 = vsel %vm33, %v21, 0
    %37 = vmatprep.subr.mxu0 0.0
    %38 = vmatpush1.msra.mxu0 0.0
    %39 = vmatprep.subr.mxu0 0.0
    %40 = vmatpush1.msra.mxu0 0.0
    %41 = vmatprep.subr.mxu0 0.0
    %42 = vmatpush1.msra.mxu0 0.0
    %43 = vmatprep.subr.mxu0 0.0
    %44 = vmatpush1.msra.mxu0 0.0
    %45 = vmatprep.subr.mxu0 0.0
    %46 = vmatpush1.msra.mxu0 0.0
    %47 = vmatprep.subr.mxu0 0.0
    %48 = vmatpush1.msra.mxu0 0.0
    %49 = vmatprep.subr.mxu0 0.0
    %50 = vmatpush1.msra.mxu0 0.0
    %51 = vmatprep.subr.mxu0 0.0
    %52 = vmatpush1.msra.mxu0 0.0
    %53 = vmatprep.subr.mxu0 0.0
    %54 = vmatpush1.msra.mxu0 0.0
    %55 = vmatprep.subr.mxu0 0.0
    %56 = vmatpush1.msra.mxu0 0.0
    %57 = vmatprep.subr.mxu0 0.0
    %58 = vmatpush1.msra.mxu0 0.0
    %59 = vmatprep.subr.mxu0 0.0
    %60 = vmatpush1.msra.mxu0 0.0
    %61 = vmatprep.subr.mxu0 0.0
    %62 = vmatpush1.msra.mxu0 %v25
    %63 = vmatprep.subr.mxu0 0.0
    %64 = vmatpush1.msra.mxu0 %v24
    %65 = vmatprep.subr.mxu0 0.0
    %66 = vmatpush1.msra.mxu0 %v23
    %67 = vmatprep.subr.mxu0 0.0
    %68 = vmatpush1.msra.mxu0 %v22
    %69 = vmatprep.subr.mxu0 0.0
    %70 = vmatpush2.msra.mxu0 0.0
    %71 = vmatprep.subr.mxu0 0.0
    %72 = vmatpush2.msra.mxu0 0.0
    %73 = vmatprep.subr.mxu0 0.0
    %74 = vmatpush2.msra.mxu0 0.0
    %75 = vmatprep.subr.mxu0 0.0
    %76 = vmatpush2.msra.mxu0 0.0
    %77 = vmatprep.subr.mxu0 0.0
    %78 = vmatpush2.msra.mxu0 0.0
    %79 = vmatprep.subr.mxu0 0.0
    %80 = vmatpush2.msra.mxu0 0.0
    %81 = vmatprep.subr.mxu0 0.0
    %82 = vmatpush2.msra.mxu0 0.0
    %83 = vmatprep.subr.mxu0 0.0
    %84 = vmatpush2.msra.mxu0 0.0
    %85 = vmatprep.subr.mxu0 0.0
    %86 = vmatpush2.msra.mxu0 0.0
    %87 = vmatprep.subr.mxu0 0.0
    %88 = vmatpush2.msra.mxu0 0.0
    %89 = vmatprep.subr.mxu0 0.0
    %90 = vmatpush2.msra.mxu0 0.0
    %91 = vmatprep.subr.mxu0 0.0
    %92 = vmatpush2.msra.mxu0 0.0
    %93 = vmatprep.subr.mxu0 0.0
    %94 = vmatpush2.msra.mxu0 0.0
    %95 = vmatprep.subr.mxu0 0.0
    %96 = vmatpush2.msra.mxu0 0.0
    %97 = vmatprep.subr.mxu0 0.0
    %98 = vmatpush2.msra.mxu0 0.0
    %99 = vmatprep.subr.mxu0 0.0
    %100 = vmatpush2.msra.mxu0 0.0
    %101 = vmatprep.mubr.f32.mxu0 0.0
    %102 = vmatmul.mubr.f32.gmra.mxu0 %v35
    %v103 = vpop.f32.mrf.mxu0
    %v104 = vadd.f32 %v31, %v103
    %v105 = vpop.f32.mrf.mxu0
    %106 = vdwg.mxu0
    %v107 = vld [vmem:[%s3] sm:$0xff]
    %v108 = vld [vmem:[%s3 + $0x8] sm:$0xff]
    %v109 = vld [vmem:[%s4] sm:$0x1]
    %v111 = vlaneseq
    %v112 = vshrl.u32 %v111, 7
    %v113 = vsub.s32 0, %v112
    %v114 = vrot.slane %v109, %v113
    %vm116 = vcmask 130048
    %v118 = vsel %vm116, %v104, 0
    %120 = vmatprep.subr.mxu0 0.0
    %121 = vmatpush1.msra.mxu0 0.0
    %122 = vmatprep.subr.mxu0 0.0
    %123 = vmatpush1.msra.mxu0 0.0
    %124 = vmatprep.subr.mxu0 0.0
    %125 = vmatpush1.msra.mxu0 0.0
    %126 = vmatprep.subr.mxu0 0.0
    %127 = vmatpush1.msra.mxu0 0.0
    %128 = vmatprep.subr.mxu0 0.0
    %129 = vmatpush1.msra.mxu0 0.0
    %130 = vmatprep.subr.mxu0 0.0
    %131 = vmatpush1.msra.mxu0 0.0
    %132 = vmatprep.subr.mxu0 0.0
    %133 = vmatpush1.msra.mxu0 0.0
    %134 = vmatprep.subr.mxu0 0.0
    %135 = vmatpush1.msra.mxu0 0.0
    %136 = vmatprep.subr.mxu0 0.0
    %137 = vmatpush1.msra.mxu0 0.0
    %138 = vmatprep.subr.mxu0 0.0
    %139 = vmatpush1.msra.mxu0 0.0
    %140 = vmatprep.subr.mxu0 0.0
    %141 = vmatpush1.msra.mxu0 0.0
    %142 = vmatprep.subr.mxu0 0.0
    %143 = vmatpush1.msra.mxu0 0.0
    %144 = vmatprep.subr.mxu0 0.0
    %145 = vmatpush1.msra.mxu0 0.0
    %146 = vmatprep.subr.mxu0 0.0
    %147 = vmatpush1.msra.mxu0 0.0
    %148 = vmatprep.subr.mxu0 0.0
    %149 = vmatpush1.msra.mxu0 %v108
    %150 = vmatprep.subr.mxu0 0.0
    %151 = vmatpush1.msra.mxu0 %v107
    %152 = vmatprep.subr.mxu0 0.0
    %153 = vmatpush2.msra.mxu0 0.0
    %154 = vmatprep.subr.mxu0 0.0
    %155 = vmatpush2.msra.mxu0 0.0
    %156 = vmatprep.subr.mxu0 0.0
    %157 = vmatpush2.msra.mxu0 0.0
    %158 = vmatprep.subr.mxu0 0.0
    %159 = vmatpush2.msra.mxu0 0.0
    %160 = vmatprep.subr.mxu0 0.0
    %161 = vmatpush2.msra.mxu0 0.0
    %162 = vmatprep.subr.mxu0 0.0
    %163 = vmatpush2.msra.mxu0 0.0
    %164 = vmatprep.subr.mxu0 0.0
    %165 = vmatpush2.msra.mxu0 0.0
    %166 = vmatprep.subr.mxu0 0.0
    %167 = vmatpush2.msra.mxu0 0.0
    %168 = vmatprep.subr.mxu0 0.0
    %169 = vmatpush2.msra.mxu0 0.0
    %170 = vmatprep.subr.mxu0 0.0
    %171 = vmatpush2.msra.mxu0 0.0
    %172 = vmatprep.subr.mxu0 0.0
    %173 = vmatpush2.msra.mxu0 0.0
    %174 = vmatprep.subr.mxu0 0.0
    %175 = vmatpush2.msra.mxu0 0.0
    %176 = vmatprep.subr.mxu0 0.0
    %177 = vmatpush2.msra.mxu0 0.0
    %178 = vmatprep.subr.mxu0 0.0
    %179 = vmatpush2.msra.mxu0 0.0
    %180 = vmatprep.subr.mxu0 0.0
    %181 = vmatpush2.msra.mxu0 0.0
    %182 = vmatprep.subr.mxu0 0.0
    %183 = vmatpush2.msra.mxu0 0.0
    %184 = vmatprep.mubr.f32.mxu0 0.0
    %185 = vmatmul.mubr.f32.gmra.mxu0 %v118
    %v186 = vpop.f32.mrf.mxu0
    %v187 = vadd.f32 %v114, %v186
    %v188 = vpop.f32.mrf.mxu0
    %189 = vdwg.mxu0
    %190 = vst.msk [vmem:[#allocation2] sm:$0xff] %vm33, %v187
    // Predicated region
    $region22: #{tpu_custom_call.1} parent=1 // pred_check
      _
    $region23: #{tpu_custom_call.1} parent=1 // pred_check_branch
      %192 = sbr.rel (0) target = $region25
    $region24: #{tpu_custom_call.1} parent=1 // pred_region
      %s194 = ssub.s32 128, 128
      %195 = vsyncadd [#allocation3], %s194
      %s197 = sshll.u32 [#allocation2], 4
      %s198 = int_to_ptr.vmem [resolvable:$true] %s197
      %200 = dma.vmem_to_hbm [thread:$0]  %s198, 128, %s5, [#allocation3]
    $region25: #{tpu_custom_call.1} parent=1 // pred_fallthru
      _
    // Predicated region
    $region26: #{tpu_custom_call.1} parent=1 // pred_check
      _
    $region27: #{tpu_custom_call.1} parent=1 // pred_check_branch
      %202 = sbr.rel (0) target = $region29
    $region28: #{tpu_custom_call.1} parent=1 // pred_region
      %203 = dma.done [#allocation3], 128
    $region29: #{tpu_custom_call.1} parent=1 // pred_fallthru
      _
    %204 = vsyncpa [#allocation3], 1

// kernel: tpu_custom_call.1
$region0: #{tpu_custom_call.1}
  #allocation0 [shape = 'u32[]', space=smem, size = 0x4, offset = 0x4, fixed_abs, tag = 'smem constant byte address 0x4 - core index']
  #allocation1 [shape = 'u32[144,128]{1,0:T(1,128)}', space=vmem, size = 0x12000, scoped, tag = 'internal scratch']
  %s0 = inlined_call_operand.vmem [shape: f32[8,32], index: 0, kind: input, shape index: {}]
  %s1 = inlined_call_operand.vmem [shape: f32[32,16], index: 1, kind: input, shape index: {}]
  %s2 = inlined_call_operand.vmem [shape: f32[1,16], index: 2, kind: input, shape index: {}]
  %s3 = inlined_call_operand.vmem [shape: f32[16,32], index: 3, kind: input, shape index: {}]
  %s4 = inlined_call_operand.vmem [shape: f32[1,32], index: 4, kind: input, shape index: {}]
  %s5 = inlined_call_operand.hbm [shape: f32[8,32], index: 5, kind: output, shape index: {}]
  %s6 = sld [smem:[#allocation0]]
  $region30: #{tpu_custom_call.1} parent=0
    _
  %s8 = ssub.s32 1, %s6
  %s9 = scalar_select 0, %s8, %s6
  $region1: #{tpu_custom_call.1} parent=0
    #allocation2 [shape = 'u8[4096]{0}', space=vmem, size = 0x1000, scoped, tag = 'output window, operand 0, single buffered']
    #allocation3 [shape = 's32[1]{0}', space=sflag, size = 0x4, scoped, tag = 'scoped memory for tpu_custom_call.1']
    %10 = vsyncpa [#allocation3], 0
    // Predicated region
    $region2: #{tpu_custom_call.1} parent=1 // pred_check
      _
    $region3: #{tpu_custom_call.1} parent=1 // pred_check_branch
      %12 = sbr.rel (0) target = $region5
    $region4: #{tpu_custom_call.1} parent=1 // pred_region
      _
    $region5: #{tpu_custom_call.1} parent=1 // pred_fallthru
      _
    // Predicated region
    $region6: #{tpu_custom_call.1} parent=1 // pred_check
      _
    $region7: #{tpu_custom_call.1} parent=1 // pred_check_branch
      %14 = sbr.rel (0) target = $region9
    $region8: #{tpu_custom_call.1} parent=1 // pred_region
      _
    $region9: #{tpu_custom_call.1} parent=1 // pred_fallthru
      _
    // Predicated region
    $region10: #{tpu_custom_call.1} parent=1 // pred_check
      _
    $region11: #{tpu_custom_call.1} parent=1 // pred_check_branch
      %16 = sbr.rel (0) target = $region13
    $region12: #{tpu_custom_call.1} parent=1 // pred_region
      _
    $region13: #{tpu_custom_call.1} parent=1 // pred_fallthru
      _
    // Predicated region
    $region14: #{tpu_custom_call.1} parent=1 // pred_check
      _
    $region15: #{tpu_custom_call.1} parent=1 // pred_check_branch
      %18 = sbr.rel (0) target = $region17
    $region16: #{tpu_custom_call.1} parent=1 // pred_region
      _
    $region17: #{tpu_custom_call.1} parent=1 // pred_fallthru
      _
    // Predicated region
    $region18: #{tpu_custom_call.1} parent=1 // pred_check
      _
    $region19: #{tpu_custom_call.1} parent=1 // pred_check_branch
      %20 = sbr.rel (0) target = $region21
    $region20: #{tpu_custom_call.1} parent=1 // pred_region
      _
    $region21: #{tpu_custom_call.1} parent=1 // pred_fallthru
      _
    %v21 = vld [vmem:[%s0] sm:$0xff]
    %v22 = vld [vmem:[%s1] sm:$0xff]
    %v23 = vld [vmem:[%s1 + $0x8] sm:$0xff]
    %v24 = vld [vmem:[%s1 + $0x10] sm:$0xff]
    %v25 = vld [vmem:[%s1 + $0x18] sm:$0xff]
    %v26 = vld [vmem:[%s2] sm:$0x1]
    %v28 = vlaneseq
    %v29 = vshrl.u32 %v28, 7
    %v30 = vsub.s32 0, %v29
    %v31 = vrot.slane %v26, %v30
    %vm33 = vcmask 261120
    %v35 = vsel %vm33, %v21, 0
    %37 = vmatprep.subr.mxu0 0.0
    %38 = vmatpush1.msra.mxu0 0.0
    %39 = vmatprep.subr.mxu0 0.0
    %40 = vmatpush1.msra.mxu0 0.0
    %41 = vmatprep.subr.mxu0 0.0
    %42 = vmatpush1.msra.mxu0 0.0
    %43 = vmatprep.subr.mxu0 0.0
    %44 = vmatpush1.msra.mxu0 0.0
    %45 = vmatprep.subr.mxu0 0.0
    %46 = vmatpush1.msra.mxu0 0.0
    %47 = vmatprep.subr.mxu0 0.0
    %48 = vmatpush1.msra.mxu0 0.0
    %49 = vmatprep.subr.mxu0 0.0
    %50 = vmatpush1.msra.mxu0 0.0
    %51 = vmatprep.subr.mxu0 0.0
    %52 = vmatpush1.msra.mxu0 0.0
    %53 = vmatprep.subr.mxu0 0.0
    %54 = vmatpush1.msra.mxu0 0.0
    %55 = vmatprep.subr.mxu0 0.0
    %56 = vmatpush1.msra.mxu0 0.0
    %57 = vmatprep.subr.mxu0 0.0
    %58 = vmatpush1.msra.mxu0 0.0
    %59 = vmatprep.subr.mxu0 0.0
    %60 = vmatpush1.msra.mxu0 0.0
    %61 = vmatprep.subr.mxu0 0.0
    %62 = vmatpush1.msra.mxu0 %v25
    %63 = vmatprep.subr.mxu0 0.0
    %64 = vmatpush1.msra.mxu0 %v24
    %65 = vmatprep.subr.mxu0 0.0
    %66 = vmatpush1.msra.mxu0 %v23
    %67 = vmatprep.subr.mxu0 0.0
    %68 = vmatpush1.msra.mxu0 %v22
    %69 = vmatprep.subr.mxu0 0.0
    %70 = vmatpush2.msra.mxu0 0.0
    %71 = vmatprep.subr.mxu0 0.0
    %72 = vmatpush2.msra.mxu0 0.0
    %73 = vmatprep.subr.mxu0 0.0
    %74 = vmatpush2.msra.mxu0 0.0
    %75 = vmatprep.subr.mxu0 0.0
    %76 = vmatpush2.msra.mxu0 0.0
    %77 = vmatprep.subr.mxu0 0.0
    %78 = vmatpush2.msra.mxu0 0.0
    %79 = vmatprep.subr.mxu0 0.0
    %80 = vmatpush2.msra.mxu0 0.0
    %81 = vmatprep.subr.mxu0 0.0
    %82 = vmatpush2.msra.mxu0 0.0
    %83 = vmatprep.subr.mxu0 0.0
    %84 = vmatpush2.msra.mxu0 0.0
    %85 = vmatprep.subr.mxu0 0.0
    %86 = vmatpush2.msra.mxu0 0.0
    %87 = vmatprep.subr.mxu0 0.0
    %88 = vmatpush2.msra.mxu0 0.0
    %89 = vmatprep.subr.mxu0 0.0
    %90 = vmatpush2.msra.mxu0 0.0
    %91 = vmatprep.subr.mxu0 0.0
    %92 = vmatpush2.msra.mxu0 0.0
    %93 = vmatprep.subr.mxu0 0.0
    %94 = vmatpush2.msra.mxu0 0.0
    %95 = vmatprep.subr.mxu0 0.0
    %96 = vmatpush2.msra.mxu0 0.0
    %97 = vmatprep.subr.mxu0 0.0
    %98 = vmatpush2.msra.mxu0 0.0
    %99 = vmatprep.subr.mxu0 0.0
    %100 = vmatpush2.msra.mxu0 0.0
    %101 = vmatprep.mubr.f32.mxu0 0.0
    %102 = vmatmul.mubr.f32.gmra.mxu0 %v35
    %v103 = vpop.f32.mrf.mxu0
    %v104 = vadd.f32 %v31, %v103
    %v105 = vpop.f32.mrf.mxu0
    %106 = vdwg.mxu0
    %v107 = vld [vmem:[%s3] sm:$0xff]
    %v108 = vld [vmem:[%s3 + $0x8] sm:$0xff]
    %v109 = vld [vmem:[%s4] sm:$0x1]
    %v111 = vlaneseq
    %v112 = vshrl.u32 %v111, 7
    %v113 = vsub.s32 0, %v112
    %v114 = vrot.slane %v109, %v113
    %vm116 = vcmask 130048
    %v118 = vsel %vm116, %v104, 0
    %120 = vmatprep.subr.mxu0 0.0
    %121 = vmatpush1.msra.mxu0 0.0
    %122 = vmatprep.subr.mxu0 0.0
    %123 = vmatpush1.msra.mxu0 0.0
    %124 = vmatprep.subr.mxu0 0.0
    %125 = vmatpush1.msra.mxu0 0.0
    %126 = vmatprep.subr.mxu0 0.0
    %127 = vmatpush1.msra.mxu0 0.0
    %128 = vmatprep.subr.mxu0 0.0
    %129 = vmatpush1.msra.mxu0 0.0
    %130 = vmatprep.subr.mxu0 0.0
    %131 = vmatpush1.msra.mxu0 0.0
    %132 = vmatprep.subr.mxu0 0.0
    %133 = vmatpush1.msra.mxu0 0.0
    %134 = vmatprep.subr.mxu0 0.0
    %135 = vmatpush1.msra.mxu0 0.0
    %136 = vmatprep.subr.mxu0 0.0
    %137 = vmatpush1.msra.mxu0 0.0
    %138 = vmatprep.subr.mxu0 0.0
    %139 = vmatpush1.msra.mxu0 0.0
    %140 = vmatprep.subr.mxu0 0.0
    %141 = vmatpush1.msra.mxu0 0.0
    %142 = vmatprep.subr.mxu0 0.0
    %143 = vmatpush1.msra.mxu0 0.0
    %144 = vmatprep.subr.mxu0 0.0
    %145 = vmatpush1.msra.mxu0 0.0
    %146 = vmatprep.subr.mxu0 0.0
    %147 = vmatpush1.msra.mxu0 0.0
    %148 = vmatprep.subr.mxu0 0.0
    %149 = vmatpush1.msra.mxu0 %v108
    %150 = vmatprep.subr.mxu0 0.0
    %151 = vmatpush1.msra.mxu0 %v107
    %152 = vmatprep.subr.mxu0 0.0
    %153 = vmatpush2.msra.mxu0 0.0
    %154 = vmatprep.subr.mxu0 0.0
    %155 = vmatpush2.msra.mxu0 0.0
    %156 = vmatprep.subr.mxu0 0.0
    %157 = vmatpush2.msra.mxu0 0.0
    %158 = vmatprep.subr.mxu0 0.0
    %159 = vmatpush2.msra.mxu0 0.0
    %160 = vmatprep.subr.mxu0 0.0
    %161 = vmatpush2.msra.mxu0 0.0
    %162 = vmatprep.subr.mxu0 0.0
    %163 = vmatpush2.msra.mxu0 0.0
    %164 = vmatprep.subr.mxu0 0.0
    %165 = vmatpush2.msra.mxu0 0.0
    %166 = vmatprep.subr.mxu0 0.0
    %167 = vmatpush2.msra.mxu0 0.0
    %168 = vmatprep.subr.mxu0 0.0
    %169 = vmatpush2.msra.mxu0 0.0
    %170 = vmatprep.subr.mxu0 0.0
    %171 = vmatpush2.msra.mxu0 0.0
    %172 = vmatprep.subr.mxu0 0.0
    %173 = vmatpush2.msra.mxu0 0.0
    %174 = vmatprep.subr.mxu0 0.0
    %175 = vmatpush2.msra.mxu0 0.0
    %176 = vmatprep.subr.mxu0 0.0
    %177 = vmatpush2.msra.mxu0 0.0
    %178 = vmatprep.subr.mxu0 0.0
    %179 = vmatpush2.msra.mxu0 0.0
    %180 = vmatprep.subr.mxu0 0.0
    %181 = vmatpush2.msra.mxu0 0.0
    %182 = vmatprep.subr.mxu0 0.0
    %183 = vmatpush2.msra.mxu0 0.0
    %184 = vmatprep.mubr.f32.mxu0 0.0
    %185 = vmatmul.mubr.f32.gmra.mxu0 %v118
    %v186 = vpop.f32.mrf.mxu0
    %v187 = vadd.f32 %v114, %v186
    %v188 = vpop.f32.mrf.mxu0
    %189 = vdwg.mxu0
    %190 = vst.msk [vmem:[#allocation2] sm:$0xff] %vm33, %v187
    // Predicated region
    $region22: #{tpu_custom_call.1} parent=1 // pred_check
      _
    $region23: #{tpu_custom_call.1} parent=1 // pred_check_branch
      %192 = sbr.rel (0) target = $region25
    $region24: #{tpu_custom_call.1} parent=1 // pred_region
      %s194 = ssub.s32 128, 128
      %195 = vsyncadd [#allocation3], %s194
      %s197 = sshll.u32 [#allocation2], 4
      %s198 = int_to_ptr.vmem [resolvable:$true] %s197
      %200 = dma.vmem_to_hbm [thread:$0]  %s198, 128, %s5, [#allocation3]
    $region25: #{tpu_custom_call.1} parent=1 // pred_fallthru
      _
    // Predicated region
    $region26: #{tpu_custom_call.1} parent=1 // pred_check
      _
    $region27: #{tpu_custom_call.1} parent=1 // pred_check_branch
      %202 = sbr.rel (0) target = $region29
    $region28: #{tpu_custom_call.1} parent=1 // pred_region
      %203 = dma.done [#allocation3], 128
    $region29: #{tpu_custom_call.1} parent=1 // pred_fallthru
      _
    %204 = vsyncpa [#allocation3], 1

</llo_original>
